<compile_context>
chip_gen: v5e
topology: v5e:2x2
jax: 0.10.0
libtpu: 0.0.40
codegen_flags: <defaults>
</compile_context>

<pallas_src>
import functools

import jax
import jax.numpy as jnp
from jax.experimental import pallas as pl
from jax.experimental.pallas import tpu as pltpu


# ----------------------------------------------------------------------------
# Kernels
# ----------------------------------------------------------------------------
def se_kernel(x_ref, w1t_ref, w2t_ref, o_ref, *, channels_last, mul_in_input_dtype):
    """Single-pass SE block.

    channels_last=False: x_ref is (TB, C, HW)  (C on sublanes, HW on lanes).
    channels_last=True : x_ref is (TB, HW, C)  (HW on sublanes, C on lanes —
                         lane-dense when C % 128 == 0 and HW % 128 != 0).
    Weights are pre-transposed on the host: w1t (C, C_red), w2t (C_red, C).
    """
    hw = x_ref.shape[1] if channels_last else x_ref.shape[2]
    red_axis = 1 if channels_last else 2
    inv_hw = 1.0 / hw  # folded to a constant at trace time

    # AdaptiveAvgPool2d(1): f32-accumulated mean computed straight from the ref
    # (no full-block f32 temp is materialized).
    y = jnp.sum(x_ref[...], axis=red_axis, dtype=jnp.float32) * inv_hw   # (TB, C)

    # fc1 (bias=False) + ReLU, fc2 (bias=False) + Sigmoid — all in f32.
    h = jnp.maximum(jnp.dot(y, w1t_ref[...], preferred_element_type=jnp.float32), 0.0)
    s = jax.nn.sigmoid(jnp.dot(h, w2t_ref[...], preferred_element_type=jnp.float32))

    # Channel-wise scale.  On bf16-VALU chips with non-f32 inputs multiply in
    # the input dtype (halves vld/VALU/vst traffic in the dominant store pass);
    # otherwise keep the f32 path.
    scale = s[:, None, :] if channels_last else s[:, :, None]
    if mul_in_input_dtype:
        o_ref[...] = x_ref[...] * scale.astype(x_ref.dtype)
    else:
        o_ref[...] = (x_ref[...].astype(jnp.float32) * scale).astype(o_ref.dtype)


def scale_kernel(x_ref, s_ref, o_ref, *, mul_in_input_dtype):
    """Fallback pass 2: elementwise x * s (s pre-shaped to broadcast over x)."""
    if mul_in_input_dtype:
        o_ref[...] = x_ref[...] * s_ref[...].astype(x_ref.dtype)
    else:
        o_ref[...] = (x_ref[...].astype(jnp.float32) * s_ref[...]).astype(o_ref.dtype)


# ----------------------------------------------------------------------------
# Host-side configuration helpers (all static / trace-time)
# ----------------------------------------------------------------------------
def _vmem_capacity_bytes():
    try:
        return int(pltpu.get_tpu_info().vmem_capacity_bytes)
    except Exception:
        return 64 * 1024 * 1024   # conservative default: v7x physical VMEM


def _mul_in_input_dtype(dtype):
    """Use a native-dtype multiply for the scale pass only on bf16-VALU chips."""
    if jnp.dtype(dtype) == jnp.dtype(jnp.float32):
        return False
    try:
        kind = jax.devices()[0].device_kind.lower()
    except Exception:
        return False
    # v2-v5 have no bf16 VALU; keep the f32 path there.
    return not any(old in kind for old in ("v2", "v3", "v4", "v5"))


def _pick_batch_tile(b, per_batch_bytes, block_budget_bytes, min_grid=4):
    """Largest divisor of b that (a) keeps one block under the VMEM budget and
    (b) keeps the grid at >= min_grid steps (pipelining / megacore), preferring
    an even number of grid steps.  Returns 0 if even tb=1 does not fit."""
    cap_vmem = block_budget_bytes // max(1, per_batch_bytes)
    if cap_vmem < 1:
        return 0
    cap_grid = max(1, b // min(b, min_grid))          # don't collapse the grid
    cap = max(1, min(cap_vmem, cap_grid, b))
    divisors = [d for d in range(1, cap + 1) if b % d == 0]
    best = max(divisors)
    even = [d for d in divisors if (b // d) % 2 == 0]  # even grid helps v7x megacore
    if even and 2 * max(even) >= best:
        best = max(even)
    return best


# ----------------------------------------------------------------------------
# Wrapper
# ----------------------------------------------------------------------------
@functools.partial(jax.jit, static_argnames=("channels_last", "block_budget_bytes"))
def se_layer(x, w1, w2, *, channels_last=False, block_budget_bytes=None):
    """SELayer.forward.

    channels_last=False: x is (B, C, H, W) — matches the PyTorch module.
    channels_last=True : x is (B, H, W, C) — use when the surrounding model
        already produces NHWC (lane-dense C); no transpose is inserted here.
    w1: (C//r, C), w2: (C, C//r) — torch nn.Linear weights (bias=False).
    """
    if channels_last:
        b, h, w, c = x.shape
        hw = h * w
        x_flat = x.reshape(b, hw, c)
    else:
        b, c, h, w = x.shape
        hw = h * w
        x_flat = x.reshape(b, c, hw)
    c_red = w1.shape[0]

    # Pre-transpose weights on the host: pure layout plumbing, free at runtime.
    w1t = w1.T        # (C, C_red)
    w2t = w2.T        # (C_red, C)

    itemsize = jnp.dtype(x.dtype).itemsize
    weight_bytes = (w1.size + w2.size) * jnp.dtype(w1.dtype).itemsize

    # Generation-aware VMEM budgeting: 2x input block + 2x output block +
    # 2x (w1t + w2t) double-buffered + compiler slack must fit under the limit
    # (v7x has only 64 MiB physical VMEM; 128 MiB on v5e/v6e).
    vmem_cap = _vmem_capacity_bytes()
    vmem_limit = int(min(vmem_cap * 7 // 8, 96 * 1024 * 1024))
    slack = 2 * 1024 * 1024
    if block_budget_bytes is None:
        block_budget = (vmem_limit - 4 * weight_bytes - slack) // 4
        block_budget = int(max(128 * 1024, min(block_budget, 24 * 1024 * 1024)))
    else:
        block_budget = int(block_budget_bytes)

    mul_native = _mul_in_input_dtype(x.dtype)
    per_batch = c * hw * itemsize
    tb = _pick_batch_tile(b, per_batch, block_budget)

    if tb >= 1:
        # ---------------- single-pass path ----------------
        grid_b = b // tb
        blk = (tb, hw, c) if channels_last else (tb, c, hw)
        cost = pl.CostEstimate(
            flops=int(b * (4 * c * c_red + 2 * c * hw)),
            transcendentals=int(b * c),
            bytes_accessed=int(2 * b * c * hw * itemsize + 2 * weight_bytes),
        )
        out_flat = pl.pallas_call(
            functools.partial(se_kernel, channels_last=channels_last,
                              mul_in_input_dtype=mul_native),
            out_shape=jax.ShapeDtypeStruct(x_flat.shape, x.dtype),
            grid_spec=pltpu.PrefetchScalarGridSpec(
                num_scalar_prefetch=0,
                grid=(grid_b,),
                in_specs=[
                    pl.BlockSpec(blk, lambda i: (i, 0, 0)),
                    pl.BlockSpec((c, c_red), lambda i: (0, 0)),
                    pl.BlockSpec((c_red, c), lambda i: (0, 0)),
                ],
                out_specs=pl.BlockSpec(blk, lambda i: (i, 0, 0)),
            ),
            compiler_params=pltpu.CompilerParams(
                dimension_semantics=("parallel",),
                vmem_limit_bytes=vmem_limit,
            ),
            cost_estimate=cost,
        )(x_flat, w1t, w2t)
        return out_flat.reshape(x.shape)

    # ---------------- fallback: one batch element too big for a VMEM block ----
    # Pass 1 (XLA): pooled mean + FC + sigmoid (microscopic compute, costs one
    # extra HBM read of x).  Pass 2 (Pallas): spatially tiled channel scale.
    red_axis = 1 if channels_last else 2
    y = jnp.mean(x_flat, axis=red_axis, dtype=jnp.float32)              # (B, C)
    hdn = jnp.maximum(jnp.dot(y, w1t.astype(jnp.float32)), 0.0)         # (B, C_red)
    s = jax.nn.sigmoid(jnp.dot(hdn, w2t.astype(jnp.float32)))           # (B, C)

    align = 8 if channels_last else 128     # sublane vs lane tiling granularity
    if per_batch <= block_budget or hw <= align:
        hw_tile = hw
    else:
        lane_budget = block_budget // max(1, c * itemsize)
        hw_tile = max(align, (lane_budget // align) * align)
        hw_tile = min(hw_tile, hw)
    # TODO(synk): if C alone is so large that (1, C, 128) exceeds the budget,
    # an additional channel-tiling pass would be needed (not implemented).
    n_hw = -(-hw // hw_tile)

    if channels_last:
        s3 = s.reshape(b, 1, c)
        x_blk, x_map = (1, hw_tile, c), (lambda i, j: (i, j, 0))
        s_blk = (1, 1, c)
    else:
        s3 = s.reshape(b, c, 1)
        x_blk, x_map = (1, c, hw_tile), (lambda i, j: (i, 0, j))
        s_blk = (1, c, 1)

    cost_fb = pl.CostEstimate(
        flops=int(b * c * hw),
        transcendentals=0,
        bytes_accessed=int(2 * b * c * hw * itemsize),
    )
    out_flat = pl.pallas_call(
        functools.partial(scale_kernel, mul_in_input_dtype=mul_native),
        out_shape=jax.ShapeDtypeStruct(x_flat.shape, x.dtype),
        grid_spec=pltpu.PrefetchScalarGridSpec(
            num_scalar_prefetch=0,
            grid=(b, n_hw),
            in_specs=[
                pl.BlockSpec(x_blk, x_map),
                pl.BlockSpec(s_blk, lambda i, j: (i, 0, 0)),
            ],
            out_specs=pl.BlockSpec(x_blk, x_map),
        ),
        compiler_params=pltpu.CompilerParams(
            dimension_semantics=("parallel", "parallel"),
            vmem_limit_bytes=vmem_limit,
        ),
        cost_estimate=cost_fb,
    )(x_flat, s3)
    return out_flat.reshape(x.shape)


# ----------------------------------------------------------------------------
# Pure-JAX reference (mirrors SELayer.forward)
# ----------------------------------------------------------------------------
def reference(x, w1, w2):
    y = jnp.mean(x, axis=(2, 3))                        # (B, C)
    y = jnp.maximum(y @ w1.T, 0.0)                      # (B, C//r)
    y = jax.nn.sigmoid(y @ w2.T)                        # (B, C)
    return x * y[:, :, None, None]


if __name__ == "__main__":
    key = jax.random.PRNGKey(0)
    k_x, k_w1, k_w2, k_x2, k_w1b, k_w2b = jax.random.split(key, 6)

    # --- primary path: NCHW, matches the PyTorch module signature ---
    B, C, H, W = 2, 4, 16, 16
    reduction = 2
    C_red = C // reduction
    x = jax.random.normal(k_x, (B, C, H, W), dtype=jnp.float32)
    w1 = jax.random.normal(k_w1, (C_red, C), dtype=jnp.float32) * (1.0 / C ** 0.5)
    w2 = jax.random.normal(k_w2, (C, C_red), dtype=jnp.float32) * (1.0 / C_red ** 0.5)

    out = se_layer(x, w1, w2)
    jax.block_until_ready(out)
    ref = reference(x, w1, w2)
    assert jnp.allclose(out, ref, atol=1e-5, rtol=1e-5), "NCHW path mismatch"

    # --- channels-last (lane-dense) path on the same data ---
    x_nhwc = jnp.transpose(x, (0, 2, 3, 1))
    out_nhwc = se_layer(x_nhwc, w1, w2, channels_last=True)
    jax.block_until_ready(out_nhwc)
    assert jnp.allclose(out_nhwc, jnp.transpose(ref, (0, 2, 3, 1)),
                        atol=1e-5, rtol=1e-5), "NHWC path mismatch"

    # --- forced tiny budget: exercises the two-pass fallback and the
    #     non-divisible spatial edge (hw = 144, lane tile = 128) ---
    B2, C2, H2, W2 = 2, 8, 12, 12
    C2_red = C2 // reduction
    x2 = jax.random.normal(k_x2, (B2, C2, H2, W2), dtype=jnp.float32)
    w1b = jax.random.normal(k_w1b, (C2_red, C2), dtype=jnp.float32) * (1.0 / C2 ** 0.5)
    w2b = jax.random.normal(k_w2b, (C2, C2_red), dtype=jnp.float32) * (1.0 / C2_red ** 0.5)
    out2 = se_layer(x2, w1b, w2b, block_budget_bytes=2048)
    jax.block_until_ready(out2)
    ref2 = reference(x2, w1b, w2b)
    assert jnp.allclose(out2, ref2, atol=1e-5, rtol=1e-5), "fallback path mismatch"

    print("KERNEL_OK")
</pallas_src>

<mosaic_0001>
module attributes {stable_mosaic.version = 11 : i64} {
  func.func @se_kernel(%arg0: i32, %arg1: memref<1x4x256xf32, #tpu.memory_space<vmem>>, %arg2: memref<4x2xf32, #tpu.memory_space<vmem>>, %arg3: memref<2x4xf32, #tpu.memory_space<vmem>>, %arg4: memref<1x4x256xf32, #tpu.memory_space<vmem>>) attributes {dimension_semantics = [#tpu.dimension_semantics<parallel>], iteration_bounds = array<i64: 2>, scalar_prefetch = 0 : i64, scratch_operands = 0 : i64, tpu.core_type = #tpu.core_type<tc>, window_params = [{transform_indices = @transform_0, window_bounds = array<i64: 1, 4, 256>}, {pipeline_mode = #tpu.pipeline_mode<synchronous>, transform_indices = @transform_1, window_bounds = array<i64: 4, 2>}, {pipeline_mode = #tpu.pipeline_mode<synchronous>, transform_indices = @transform_2, window_bounds = array<i64: 2, 4>}, {transform_indices = @transform_3, window_bounds = array<i64: 1, 4, 256>}]} {
    %c0 = arith.constant 0 : index
    %c0_0 = arith.constant 0 : index
    %c0_1 = arith.constant 0 : index
    %0 = vector.load %arg1[%c0, %c0_0, %c0_1] : memref<1x4x256xf32, #tpu.memory_space<vmem>>, vector<1x4x256xf32>
    %cst = arith.constant dense<0.000000e+00> : vector<1x4xf32>
    %1 = vector.multi_reduction <add>, %0, %cst [2] : vector<1x4x256xf32> to vector<1x4xf32>
    %cst_2 = arith.constant 3.906250e-03 : f32
    %2 = vector.broadcast %cst_2 : f32 to vector<1x4xf32>
    %3 = arith.mulf %1, %2 : vector<1x4xf32>
    %c0_3 = arith.constant 0 : index
    %c0_4 = arith.constant 0 : index
    %4 = vector.load %arg2[%c0_3, %c0_4] : memref<4x2xf32, #tpu.memory_space<vmem>>, vector<4x2xf32>
    %cst_5 = arith.constant dense<0.000000e+00> : vector<1x2xf32>
    %5 = tpu.matmul %3, %4, %cst_5 {dimension_numbers = #tpu.dot_dimension_numbers<[1], [0], [0], [1], [0, 0, 1, 1], [], []>} : vector<1x4xf32>, vector<4x2xf32>, vector<1x2xf32> -> vector<1x2xf32>
    %cst_6 = arith.constant 0.000000e+00 : f32
    %6 = vector.broadcast %cst_6 : f32 to vector<1x2xf32>
    %7 = arith.maximumf %5, %6 : vector<1x2xf32>
    %c0_7 = arith.constant 0 : index
    %c0_8 = arith.constant 0 : index
    %8 = vector.load %arg3[%c0_7, %c0_8] : memref<2x4xf32, #tpu.memory_space<vmem>>, vector<2x4xf32>
    %cst_9 = arith.constant dense<0.000000e+00> : vector<1x4xf32>
    %9 = tpu.matmul %7, %8, %cst_9 {dimension_numbers = #tpu.dot_dimension_numbers<[1], [0], [0], [1], [0, 0, 1, 1], [], []>} : vector<1x2xf32>, vector<2x4xf32>, vector<1x4xf32> -> vector<1x4xf32>
    %10 = arith.negf %9 : vector<1x4xf32>
    %11 = math.exp %10 : vector<1x4xf32>
    %cst_10 = arith.constant 1.000000e+00 : f32
    %12 = vector.broadcast %cst_10 : f32 to vector<1x4xf32>
    %13 = arith.addf %12, %11 : vector<1x4xf32>
    %14 = arith.divf %12, %13 : vector<1x4xf32>
    %15 = vector.shape_cast %14 : vector<1x4xf32> to vector<1x4x1xf32>
    %c0_11 = arith.constant 0 : index
    %c0_12 = arith.constant 0 : index
    %c0_13 = arith.constant 0 : index
    %16 = vector.load %arg1[%c0_11, %c0_12, %c0_13] : memref<1x4x256xf32, #tpu.memory_space<vmem>>, vector<1x4x256xf32>
    %17 = vector.broadcast %15 : vector<1x4x1xf32> to vector<1x4x256xf32>
    %18 = arith.mulf %16, %17 : vector<1x4x256xf32>
    %c0_14 = arith.constant 0 : index
    %c0_15 = arith.constant 0 : index
    %c0_16 = arith.constant 0 : index
    %19 = vector.load %arg4[%c0_14, %c0_15, %c0_16] : memref<1x4x256xf32, #tpu.memory_space<vmem>>, vector<1x4x256xf32>
    tpu.vector_store %arg4[%c0_14, %c0_15, %c0_16], %18 {strides = array<i32>} : memref<1x4x256xf32, #tpu.memory_space<vmem>>, vector<1x4x256xf32>,
    return
  }
  func.func @transform_0(%arg0: i32) -> (i32, i32, i32) {
    %c0_i32 = arith.constant 0 : i32
    %c0_i32_0 = arith.constant 0 : i32
    %c0_i32_1 = arith.constant 0 : i32
    return %arg0, %c0_i32, %c0_i32_0 : i32, i32, i32
  }
  func.func @transform_1(%arg0: i32) -> (i32, i32) {
    %c0_i32 = arith.constant 0 : i32
    %c0_i32_0 = arith.constant 0 : i32
    %c0_i32_1 = arith.constant 0 : i32
    return %c0_i32, %c0_i32_0 : i32, i32
  }
  func.func @transform_2(%arg0: i32) -> (i32, i32) {
    %c0_i32 = arith.constant 0 : i32
    %c0_i32_0 = arith.constant 0 : i32
    %c0_i32_1 = arith.constant 0 : i32
    return %c0_i32, %c0_i32_0 : i32, i32
  }
  func.func @transform_3(%arg0: i32) -> (i32, i32, i32) {
    %c0_i32 = arith.constant 0 : i32
    %c0_i32_0 = arith.constant 0 : i32
    %c0_i32_1 = arith.constant 0 : i32
    return %arg0, %c0_i32, %c0_i32_0 : i32, i32, i32
  }
}

</mosaic_0001>

<llo_original>
// kernel: se_layer.1
$region0: #{se_layer.1}
  #allocation0 [shape = 'u32[]', space=smem, size = 0x4, offset = 0x4, fixed_abs, tag = 'smem constant byte address 0x4 - core index']
  #allocation1 [shape = 'u32[72,128]{1,0:T(1,128)}', space=vmem, size = 0x9000, scoped, tag = 'internal scratch']
  %s0 = inlined_call_operand.vmem [shape: f32[2,4,256], index: 0, kind: input, shape index: {}]
  %s1 = inlined_call_operand.vmem [shape: f32[4,2], index: 1, kind: input, shape index: {}]
  %s2 = inlined_call_operand.vmem [shape: f32[2,4], index: 2, kind: input, shape index: {}]
  %s3 = inlined_call_operand.vmem [shape: f32[2,4,256], index: 3, kind: output, shape index: {}]
  %s4 = sld [smem:[#allocation0]]
  $region45: #{se_layer.1} parent=0
    _
  %s6 = ssub.s32 1, %s4
  %s7 = scalar_select 0, %s6, %s4
  loop: start=0, step=1, limit=4
  $region2: #{se_layer.1} parent=0 // loop_pre_header
    _
  $region3: #{se_layer.1} parent=0 // loop_header
    %s9 = sphi 0, %s13
    %p10 = scmp.ge.s32.totalorder %s9, 4
    %s19 = sphi 0, %s21
    %s22 = sphi 0, %s19
    %s23 = sphi 0, %s22
    %s39 = sphi 0, %s23
    %s43 = sphi 0, %s43
    %s45 = sphi 0, %s43
    %s46 = sphi 0, %s45
    %s60 = sphi 0, %s46
    %s64 = sphi 0, %s64
    %s66 = sphi 0, %s64
    %s67 = sphi 0, %s66
    %s81 = sphi 0, %s67
    %s87 = sphi 0, %s89
    %s90 = sphi 0, %s87
    %s91 = sphi 0, %s90
    %s107 = sphi 0, %s91
  $region4: #{se_layer.1} parent=0 // loop_header_branch
    %12 = sbr.rel (%p10) target = $region8
  $region5: #{se_layer.1} parent=0 // loop_body
    %s14 = ssub.s32 %s9, 1
    %s15 = ssub.s32 %s9, 2
    %s16 = sadd.s32 %s9, 1
    %s17 = ssub.s32 %s9, %s16
    %p18 = scmp.eq.s32.totalorder %s17, 0
    %s20 = sadd.s32 %s19, 1
    %s21 = scalar_select %p18, %s19, %s20
    %p24 = pneg %p18
    %p25 = scmp.eq.s32.totalorder %s9, 1
    %p26 = por %p24, %p25
    %p27 = scmp.ne.s32.totalorder %s19, %s22
    %p28 = scmp.eq.s32.totalorder %s9, 0
    %p29 = por %p27, %p28
    %p30 = scmp.ne.s32.totalorder %s19, %s22
    %p31 = scmp.eq.s32.totalorder %s14, 1
    %p32 = por %p30, %p31
    %p33 = scmp.ne.s32.totalorder %s22, %s23
    %p34 = scmp.eq.s32.totalorder %s14, 0
    %p35 = por %p33, %p34
    %p36 = scmp.ne.s32.totalorder %s22, %s23
    %p37 = scmp.eq.s32.totalorder %s15, 1
    %p38 = por %p36, %p37
    %p40 = scmp.ne.s32.totalorder %s23, %s39
    %p41 = scmp.eq.s32.totalorder %s15, 0
    %p42 = por %p40, %p41
    %s44 = sadd.s32 %s43, 1
    %p47 = scmp.eq.s32.totalorder %s9, 1
    %p48 = scmp.ne.s32.totalorder %s43, %s45
    %p49 = scmp.eq.s32.totalorder %s9, 0
    %p50 = por %p48, %p49
    %p51 = scmp.ne.s32.totalorder %s43, %s45
    %p52 = scmp.eq.s32.totalorder %s14, 1
    %p53 = por %p51, %p52
    %p54 = scmp.ne.s32.totalorder %s45, %s46
    %p55 = scmp.eq.s32.totalorder %s14, 0
    %p56 = por %p54, %p55
    %p57 = scmp.ne.s32.totalorder %s45, %s46
    %p58 = scmp.eq.s32.totalorder %s15, 1
    %p59 = por %p57, %p58
    %p61 = scmp.ne.s32.totalorder %s46, %s60
    %p62 = scmp.eq.s32.totalorder %s15, 0
    %p63 = por %p61, %p62
    %s65 = sadd.s32 %s64, 1
    %p68 = scmp.eq.s32.totalorder %s9, 1
    %p69 = scmp.ne.s32.totalorder %s64, %s66
    %p70 = scmp.eq.s32.totalorder %s9, 0
    %p71 = por %p69, %p70
    %p72 = scmp.ne.s32.totalorder %s64, %s66
    %p73 = scmp.eq.s32.totalorder %s14, 1
    %p74 = por %p72, %p73
    %p75 = scmp.ne.s32.totalorder %s66, %s67
    %p76 = scmp.eq.s32.totalorder %s14, 0
    %p77 = por %p75, %p76
    %p78 = scmp.ne.s32.totalorder %s66, %s67
    %p79 = scmp.eq.s32.totalorder %s15, 1
    %p80 = por %p78, %p79
    %p82 = scmp.ne.s32.totalorder %s67, %s81
    %p83 = scmp.eq.s32.totalorder %s15, 0
    %p84 = por %p82, %p83
    %s85 = ssub.s32 %s9, %s16
    %p86 = scmp.eq.s32.totalorder %s85, 0
    %s88 = sadd.s32 %s87, 1
    %s89 = scalar_select %p86, %s87, %s88
    %p92 = pneg %p86
    %p93 = scmp.eq.s32.totalorder %s9, 1
    %p94 = por %p92, %p93
    %p95 = scmp.ne.s32.totalorder %s87, %s90
    %p96 = scmp.eq.s32.totalorder %s9, 0
    %p97 = por %p95, %p96
    %p98 = scmp.ne.s32.totalorder %s87, %s90
    %p99 = scmp.eq.s32.totalorder %s14, 1
    %p100 = por %p98, %p99
    %p101 = scmp.ne.s32.totalorder %s90, %s91
    %p102 = scmp.eq.s32.totalorder %s14, 0
    %p103 = por %p101, %p102
    %p104 = scmp.ne.s32.totalorder %s90, %s91
    %p105 = scmp.eq.s32.totalorder %s15, 1
    %p106 = por %p104, %p105
    %p108 = scmp.ne.s32.totalorder %s91, %s107
    %p109 = scmp.eq.s32.totalorder %s15, 0
    %p110 = por %p108, %p109
    %p111 = scmp.le.s32.totalorder 1, %s9
    %p112 = scmp.lt.s32.totalorder %s9, 3
    %p113 = pnand %p111, %p112
    %p114 = pneg %p113
    // Predicated region
    $region9: #{se_layer.1} parent=5 // pred_check
      _
    $region10: #{se_layer.1} parent=5 // pred_check_branch
      %116 = sbr.rel (%p113) target = $region12
    $region11: #{se_layer.1} parent=5 // pred_region
      %s117 = ssub.s32 %s9, 1
      // Predicated region
      $region13: #{se_layer.1} parent=11 // pred_check
        %p118 = pneg %p56
      $region14: #{se_layer.1} parent=11 // pred_check_branch
        %120 = sbr.rel (%p118) target = $region16
      $region15: #{se_layer.1} parent=11 // pred_region
        _
      $region16: #{se_layer.1} parent=11 // pred_fallthru
        _
      // Predicated region
      $region17: #{se_layer.1} parent=11 // pred_check
        %p121 = pneg %p77
      $region18: #{se_layer.1} parent=11 // pred_check_branch
        %123 = sbr.rel (%p121) target = $region20
      $region19: #{se_layer.1} parent=11 // pred_region
        _
      $region20: #{se_layer.1} parent=11 // pred_fallthru
        _
    $region12: #{se_layer.1} parent=5 // pred_fallthru
      _
    %p124 = scmp.lt.s32.totalorder %s9, 2
    // Predicated region
    $region21: #{se_layer.1} parent=5 // pred_check
      %p125 = pneg %p124
    $region22: #{se_layer.1} parent=5 // pred_check_branch
      %127 = sbr.rel (%p125) target = $region24
    $region23: #{se_layer.1} parent=5 // pred_region
      // Predicated region
      $region25: #{se_layer.1} parent=23 // pred_check
        %p128 = pneg %p29
      $region26: #{se_layer.1} parent=23 // pred_check_branch
        %130 = sbr.rel (%p128) target = $region28
      $region27: #{se_layer.1} parent=23 // pred_region
        %p131 = scmp.lt.s32.totalorder %s9, 1
        %s132 = scalar_select %p131, %s9, 1
        %s133 = smul.addr %s132, 2
        %s134 = smul.addr %s133, 4
        %s135 = scalar_lea.vmem %s0, %s134
      $region28: #{se_layer.1} parent=23 // pred_fallthru
        _
    $region24: #{se_layer.1} parent=5 // pred_fallthru
      _
    %p136 = scmp.le.s32.totalorder 1, %s9
    %p137 = scmp.lt.s32.totalorder %s9, 3
    %p138 = pnand %p136, %p137
    %p139 = pneg %p138
    // Predicated region
    $region29: #{se_layer.1} parent=5 // pred_check
      _
    $region30: #{se_layer.1} parent=5 // pred_check_branch
      %141 = sbr.rel (%p138) target = $region32
    $region31: #{se_layer.1} parent=5 // pred_region
      %s142 = ssub.s32 %s9, 1
      %p143 = scmp.lt.s32.totalorder %s14, 1
      %s144 = scalar_select %p143, %s14, 1
      %s145 = smul.addr %s144, 2
      %s146 = smul.addr %s145, 4
      %s147 = scalar_lea.vmem %s0, %s146
      %p148 = pneg %p35
      %p149 = pneg %p32
      %p150 = pneg %p56
      %p151 = pneg %p53
      %p152 = pneg %p77
      %p153 = pneg %p74
      %p154 = pneg %p103
      %p155 = pneg %p100
      %p156 = scmp.lt.s32.totalorder %s14, 1
      %s157 = scalar_select %p156, %s14, 1
      %s158 = smul.addr %s157, 2
      %s159 = smul.addr %s158, 4
      %s160 = scalar_lea.vmem %s3, %s159
      %p161 = scmp.lt.s32.totalorder %s14, 1
      %s162 = scalar_select %p161, %s14, 1
      %s163 = smul.addr %s162, 2
      %s164 = smul.addr %s163, 4
      %s165 = scalar_lea.vmem %s0, %s164
      %p166 = scmp.lt.s32.totalorder %s14, 1
      %s167 = scalar_select %p166, %s14, 1
      %s168 = smul.addr %s167, 2
      %s169 = smul.addr %s168, 4
      %s170 = scalar_lea.vmem %s3, %s169
      %v171 = vld [vmem:[%s165] sm:$0xff]
      %173 = vst [vmem:[#allocation1] ss:$2 sm:$0xff] %v171
      %v174 = vld.sshfl [vmem:[#allocation1] sm:$0xff pattern:$0x75316420]
      %v175 = vld.sshfl [vmem:[#allocation1 + $0x8] sm:$0xff pattern:$0x75316420]
      %vm178 = vcmask 1043456
      %v179 = vsel %vm178, %v174, 0.0
      %v180 = vsel %vm178, %v175, 0.0
      %v181 = vadd.f32 %v179, %v180
      %182 = vadd.xlane.f32.xlu0 %v181
      %v183 = vpop.xlane.xlu0 %182
      %v184 = vmul.f32 %v183, 0.00390625
      %v185 = vld [vmem:[%s1] sm:$0xf]
      %v187 = vlaneseq
      %v188 = vand.u32 %v187, 127
      %v189 = vperm.slane %v184, %v188
      %vm190 = vcmask 31744
      %v191 = vsel %vm190, %v189, 0
      %v194 = vsel %vm178, %v185, 0
      %196 = vmatpush.msra.mxu0 0.0
      %197 = vmatpush.msra.mxu0 0.0
      %198 = vmatpush.msra.mxu0 0.0
      %199 = vmatpush.msra.mxu0 0.0
      %200 = vmatpush.msra.mxu0 0.0
      %201 = vmatpush.msra.mxu0 0.0
      %202 = vmatpush.msra.mxu0 0.0
      %203 = vmatpush.msra.mxu0 0.0
      %204 = vmatpush.msra.mxu0 0.0
      %205 = vmatpush.msra.mxu0 0.0
      %206 = vmatpush.msra.mxu0 0.0
      %207 = vmatpush.msra.mxu0 0.0
      %208 = vmatpush.msra.mxu0 0.0
      %209 = vmatpush.msra.mxu0 0.0
      %210 = vmatpush.msra.mxu0 0.0
      %211 = vmatpush.msra.mxu0 %v194
      %212 = vmatmul.f32.gmra.mxu0 %v191
      %v213 = vpop.f32.mrf.mxu0
      %v214 = vadd.f32 0.0, %v213
      %215 = vdwg.mxu0
      %v216 = vmax.f32 %v214, 0.0
      %v217 = vld [vmem:[%s2] sm:$0x3]
      %vm218 = vcmask 15360
      %v220 = vsel %vm218, %v216, 0
      %vm222 = vcmask 1041408
      %v224 = vsel %vm222, %v217, 0
      %226 = vmatpush.msra.mxu0 0.0
      %227 = vmatpush.msra.mxu0 0.0
      %228 = vmatpush.msra.mxu0 0.0
      %229 = vmatpush.msra.mxu0 0.0
      %230 = vmatpush.msra.mxu0 0.0
      %231 = vmatpush.msra.mxu0 0.0
      %232 = vmatpush.msra.mxu0 0.0
      %233 = vmatpush.msra.mxu0 0.0
      %234 = vmatpush.msra.mxu0 0.0
      %235 = vmatpush.msra.mxu0 0.0
      %236 = vmatpush.msra.mxu0 0.0
      %237 = vmatpush.msra.mxu0 0.0
      %238 = vmatpush.msra.mxu0 0.0
      %239 = vmatpush.msra.mxu0 0.0
      %240 = vmatpush.msra.mxu0 0.0
      %241 = vmatpush.msra.mxu0 %v224
      %242 = vmatmul.f32.gmra.mxu0 %v220
      %v243 = vpop.f32.mrf.mxu0
      %v244 = vadd.f32 0.0, %v243
      %245 = vdwg.mxu0
      %v246 = vxor.u32 %v244, 2147483648
      %v247 = vmul.f32 %v246, 1.442695
      %v248 = vpow.pop %v247
      %v249 = vadd.f32 %v248, 1.0
      %v250 = vrcp.pop %v249
      %v251 = vmul.f32 %v249, %v250
      %v252 = vsub.f32 1.0, %v251
      %v253 = vmul.f32 %v250, %v252
      %v254 = vadd.f32 %v250, %v253
      %vm255 = vweird.f32 %v249
      %vm256 = vweird.f32 %v250
      %vm257 = vmor %vm255, %vm256
      %v258 = vsel %vm257, %v250, %v254
      %v259 = vand.u32 2147483647, %v249
      %vm260 = vcmp.eq.f32.partialorder %v259, 8.507059e+37
      %v261 = vand.u32 %v249, 2147483648
      %v262 = vor.u32 1.1754944e-38, %v261
      %v263 = vsel %vm260, %v262, %v258
      %v264 = vmul.f32 1.0, %v263
      %v265 = vperm.slane %v264, 0
      %v266 = vlaneseq
      %v267 = vshrl.u32 %v266, 7
      %269 = vset.pattern.permute.xlu0 %v267
      %270 = vperm.xlu0 %269, %v265
      %v271 = vpop.permute.xlu0 %270
      %v274 = vunpack.c.l.s4 839922192
      %v275 = vunpack.c.0.s8 %v274
      %v276 = vperm.slane %v271, %v275
      %v278 = vmul.f32 %v171, %v276
      %279 = vst [vmem:[%s170] sm:$0xff] %v278
      %p280 = scmp.lt.s32.totalorder %s14, 1
      %s281 = scalar_select %p280, %s14, 1
      %s282 = smul.addr %s281, 2
      %s283 = smul.addr %s282, 4
      %s284 = scalar_lea.vmem %s3, %s283
      // Predicated region
      $region33: #{se_layer.1} parent=31 // pred_check
        %p285 = pneg %p100
      $region34: #{se_layer.1} parent=31 // pred_check_branch
        %287 = sbr.rel (%p285) target = $region36
      $region35: #{se_layer.1} parent=31 // pred_region
        _
      $region36: #{se_layer.1} parent=31 // pred_fallthru
        _
    $region32: #{se_layer.1} parent=5 // pred_fallthru
      _
    %p288 = scmp.le.s32.totalorder 2, %s9
    // Predicated region
    $region37: #{se_layer.1} parent=5 // pred_check
      %p289 = pneg %p288
    $region38: #{se_layer.1} parent=5 // pred_check_branch
      %291 = sbr.rel (%p289) target = $region40
    $region39: #{se_layer.1} parent=5 // pred_region
      %s292 = ssub.s32 %s9, 2
      // Predicated region
      $region41: #{se_layer.1} parent=39 // pred_check
        %p293 = pneg %p106
      $region42: #{se_layer.1} parent=39 // pred_check_branch
        %295 = sbr.rel (%p293) target = $region44
      $region43: #{se_layer.1} parent=39 // pred_region
        %p296 = scmp.lt.s32.totalorder %s15, 1
        %s297 = scalar_select %p296, %s15, 1
        %s298 = smul.addr %s297, 2
        %s299 = smul.addr %s298, 4
        %s300 = scalar_lea.vmem %s3, %s299
      $region44: #{se_layer.1} parent=39 // pred_fallthru
        _
    $region40: #{se_layer.1} parent=5 // pred_fallthru
      _
  $region6: #{se_layer.1} parent=0 // loop_footer
    %s13 = sadd.s32 1, %s9
  $region7: #{se_layer.1} parent=0 // loop_footer_branch
    %8 = sbr.rel target = $region3
  $region8: #{se_layer.1} parent=0 // loop_exit
    _

</llo_original>
